<compile_context>
chip_gen: v6e
topology: v6e:2x2x1
jax: 0.10.0
libtpu: 0.0.40
codegen_flags: <defaults>
</compile_context>

<pallas_src>
import jax
import jax.numpy as jnp
from jax.experimental import pallas as pl
from jax.experimental.pallas import tpu as pltpu


def _round_up(a, m):
    return (a + m - 1) // m * m


def upconv1d_kernel(x_ref, h_ref, w_ref, b_ref, o_ref, win_ref):
    # x_ref  : (1, TL, C_in)        main input rows of this tile (from padded x)
    # h_ref  : (1, 1, halo, C_in)   K-1 halo rows (first rows of the next tile)
    # w_ref  : (C_in, K*C_out_p)    flipped taps, wide layout (grid-constant)
    # b_ref  : (1, C_out_p)         padded bias, f32 (grid-constant)
    # o_ref  : (1, TL, C_out_p)     output tile, written exactly once
    # win_ref: (TL + K - 1, C_in)   VMEM scratch for the halo'd window
    TL = o_ref.shape[1]
    C_out_p = o_ref.shape[2]
    K = win_ref.shape[0] - TL + 1

    # Assemble the halo'd window in VMEM (TL is a multiple of 8, so the first store is full).
    win_ref[0:TL, :] = x_ref[0]
    if K > 1:
        win_ref[TL:TL + K - 1, :] = h_ref[0, 0]

    # One fused MXU matmul for all K taps; f32 accumulation.
    z = jnp.dot(win_ref[...], w_ref[...], preferred_element_type=jnp.float32)

    # Output-stationary shift-add of the K lane-aligned column groups, tree-reduced so the
    # 4 VALU slots can co-issue independent adds (K is small & static -> unrolled at trace).
    parts = [z[j:j + TL, j * C_out_p:(j + 1) * C_out_p] for j in range(K)]
    while len(parts) > 1:
        nxt = [parts[i] + parts[i + 1] for i in range(0, len(parts) - 1, 2)]
        if len(parts) % 2:
            nxt.append(parts[-1])
        parts = nxt
    acc = parts[0] + b_ref[...]          # bias added once, in f32

    o_ref[0] = acc.astype(o_ref.dtype)


def upconv1d(x, weight, bias, *, tl=None, compute_dtype=jnp.bfloat16):
    """x: (B, L, C_in), weight: (C_in, C_out, K) [PyTorch ConvTranspose1d layout],
    bias: (C_out,).  Returns (B, L+K-1, C_out) in x.dtype.
    compute_dtype: MXU-input dtype (bf16 default; pass jnp.float32/None for full f32)."""
    B, L, C_in = x.shape
    C_in_w, C_out, K = weight.shape
    assert C_in == C_in_w
    L_out = L + K - 1
    out_dtype = x.dtype
    if compute_dtype is None:
        compute_dtype = x.dtype

    # --- tiling -----------------------------------------------------------------------------
    if tl is None:
        tl = min(512, _round_up(L_out, 8))       # bigger tile: amortize per-grid-step overhead
    tl = max(8, _round_up(tl, 8))                # sublane alignment of output tiles
    num_tiles = pl.cdiv(L_out, tl)
    if B * num_tiles < 2 and L_out > 8:          # keep both v7x TensorCores busy
        tl = max(8, _round_up(pl.cdiv(L_out, 2), 8))
        num_tiles = pl.cdiv(L_out, tl)
    L_out_p = num_tiles * tl
    C_out_p = _round_up(max(C_out, 1), 128)      # lane-dense output channels
    halo = max(K - 1, 1)

    # --- weights: flip taps, pad channels, lay out wide: (C_in, K*C_out_p) -------------------
    w_taps = jnp.transpose(weight, (2, 0, 1))    # (K, C_in, C_out); w_taps[k] = W[:, :, k]
    w_flip = w_taps[::-1]                        # position j holds tap K-1-j
    w_flip = jnp.pad(w_flip, ((0, 0), (0, 0), (0, C_out_p - C_out)))
    w_wide = jnp.transpose(w_flip, (1, 0, 2)).reshape(C_in, K * C_out_p).astype(compute_dtype)
    b_pad = jnp.pad(bias, (0, C_out_p - C_out)).reshape(1, C_out_p).astype(jnp.float32)

    # --- input: cast first (the single pad copy moves compute_dtype bytes), then a tiny halo --
    pad_left = K - 1
    pad_right = L_out_p - L                      # >= K-1, so every halo row exists
    x_full = jnp.pad(x.astype(compute_dtype), ((0, 0), (pad_left, pad_right), (0, 0)))
    # x_full has L_out_p + K - 1 rows; main blocks only touch rows [0, L_out_p).
    if K > 1:
        idx = ((jnp.arange(num_tiles) + 1) * tl)[:, None] + jnp.arange(K - 1)[None, :]
        x_halo = jnp.take(x_full, idx.reshape(-1), axis=1).reshape(B, num_tiles, K - 1, C_in)
    else:
        x_halo = jnp.zeros((B, num_tiles, 1, C_in), compute_dtype)

    # --- per-generation-safe VMEM limit (computed, not hardcoded) ----------------------------
    cb = jnp.dtype(compute_dtype).itemsize
    ob = jnp.dtype(out_dtype).itemsize
    need = (2 * tl * C_in * cb                   # x block (double-buffered)
            + 2 * halo * C_in * cb               # halo block (double-buffered)
            + 2 * C_in * K * C_out_p * cb        # resident wide weight
            + 2 * C_out_p * 4                    # resident bias
            + 2 * tl * C_out_p * ob              # output block (double-buffered)
            + (tl + K - 1) * C_in * cb           # window scratch
            + (tl + K - 1) * K * C_out_p * 4     # z intermediate (f32)
            + 2 * tl * C_out_p * 4)              # shift-add temporaries (f32)
    vmem_limit = int(min(max(2 * need + (2 << 20), 16 << 20), 48 << 20))

    out_p = pl.pallas_call(
        upconv1d_kernel,
        out_shape=jax.ShapeDtypeStruct((B, L_out_p, C_out_p), out_dtype),
        grid_spec=pltpu.PrefetchScalarGridSpec(
            num_scalar_prefetch=0,
            grid=(B, num_tiles),
            in_specs=[
                pl.BlockSpec((1, tl, C_in), lambda b, t: (b, t, 0)),
                pl.BlockSpec((1, 1, halo, C_in), lambda b, t: (b, t, 0, 0)),
                pl.BlockSpec((C_in, K * C_out_p), lambda b, t: (0, 0)),  # resident weight
                pl.BlockSpec((1, C_out_p), lambda b, t: (0, 0)),         # resident bias
            ],
            out_specs=pl.BlockSpec((1, tl, C_out_p), lambda b, t: (b, t, 0)),
            scratch_shapes=[pltpu.VMEM((tl + K - 1, C_in), compute_dtype)],
        ),
        compiler_params=pltpu.CompilerParams(
            dimension_semantics=("parallel", "parallel"),
            vmem_limit_bytes=vmem_limit,
        ),
    )(x_full, x_halo, w_wide, b_pad)

    return out_p[:, :L_out, :C_out]


def upconv1d_reference(x, weight, bias):
    """Pure-JAX reference of nn.ConvTranspose1d (stride=1, no padding) applied in NLC layout."""
    B, L, C_in = x.shape
    _, C_out, K = weight.shape
    L_out = L + K - 1
    y = jnp.broadcast_to(bias, (B, L_out, C_out)).astype(jnp.float32)
    for k in range(K):
        zk = jnp.einsum("blc,cd->bld", x, weight[:, :, k]).astype(jnp.float32)
        y = y.at[:, k:k + L, :].add(zk)
    return y.astype(x.dtype)


if __name__ == "__main__":
    # Small shapes consistent with the module's forward (output_size == K).
    B, L, C_in, C_out, K = 2, 8, 4, 6, 5

    key = jax.random.PRNGKey(0)
    kx, kw, kb = jax.random.split(key, 3)
    x = jax.random.normal(kx, (B, L, C_in), dtype=jnp.float32)
    weight = 0.1 * jax.random.normal(kw, (C_in, C_out, K), dtype=jnp.float32)  # (C_in, C_out, K)
    bias = 0.1 * jax.random.normal(kb, (C_out,), dtype=jnp.float32)

    ref = upconv1d_reference(x, weight, bias)

    # f32 path, tl=8 -> two L-tiles per batch element: exercises the halo side-input path.
    out_f32 = jax.block_until_ready(
        upconv1d(x, weight, bias, tl=8, compute_dtype=jnp.float32))
    assert out_f32.shape == (B, L + K - 1, C_out), out_f32.shape
    assert jnp.allclose(out_f32, ref, atol=1e-5, rtol=1e-5), "f32 mismatch vs reference"

    # Default path: bf16 MXU inputs, f32 accumulation, default tile size.
    out_bf16 = jax.block_until_ready(upconv1d(x, weight, bias))
    assert out_bf16.shape == (B, L + K - 1, C_out), out_bf16.shape
    assert jnp.allclose(out_bf16, ref, atol=3e-2, rtol=3e-2), "bf16 mismatch vs reference"

    print("KERNEL_OK")
</pallas_src>

<mosaic_0001>
module attributes {stable_mosaic.version = 11 : i64} {
  func.func @upconv1d_kernel(%arg0: i32, %arg1: i32, %arg2: memref<1x8x4xf32, #tpu.memory_space<vmem>>, %arg3: memref<1x1x4x4xf32, #tpu.memory_space<vmem>>, %arg4: memref<4x640xf32, #tpu.memory_space<vmem>>, %arg5: memref<1x128xf32, #tpu.memory_space<vmem>>, %arg6: memref<1x8x128xf32, #tpu.memory_space<vmem>>, %arg7: memref<12x4xf32, #tpu.memory_space<vmem>>) attributes {dimension_semantics = [#tpu.dimension_semantics<parallel>, #tpu.dimension_semantics<parallel>], iteration_bounds = array<i64: 2, 2>, scalar_prefetch = 0 : i64, scratch_operands = 1 : i64, tpu.core_type = #tpu.core_type<tc>, window_params = [{transform_indices = @transform_0, window_bounds = array<i64: 1, 8, 4>}, {transform_indices = @transform_1, window_bounds = array<i64: 1, 1, 4, 4>}, {pipeline_mode = #tpu.pipeline_mode<synchronous>, transform_indices = @transform_2, window_bounds = array<i64: 4, 640>}, {pipeline_mode = #tpu.pipeline_mode<synchronous>, transform_indices = @transform_3, window_bounds = array<i64: 1, 128>}, {transform_indices = @transform_4, window_bounds = array<i64: 1, 8, 128>}]} {
    %c0 = arith.constant 0 : index
    %c0_0 = arith.constant 0 : index
    %c0_1 = arith.constant 0 : index
    %0 = vector.load %arg2[%c0, %c0_0, %c0_1] : memref<1x8x4xf32, #tpu.memory_space<vmem>>, vector<1x8x4xf32>
    %1 = vector.shape_cast %0 : vector<1x8x4xf32> to vector<8x4xf32>
    %c0_2 = arith.constant 0 : index
    %c0_3 = arith.constant 0 : index
    %2 = vector.load %arg7[%c0_2, %c0_3] : memref<12x4xf32, #tpu.memory_space<vmem>>, vector<8x4xf32>
    tpu.vector_store %arg7[%c0_2, %c0_3], %1 {strides = array<i32>} : memref<12x4xf32, #tpu.memory_space<vmem>>, vector<8x4xf32>,
    %c0_4 = arith.constant 0 : index
    %c0_5 = arith.constant 0 : index
    %c0_6 = arith.constant 0 : index
    %c0_7 = arith.constant 0 : index
    %3 = vector.load %arg3[%c0_4, %c0_5, %c0_6, %c0_7] : memref<1x1x4x4xf32, #tpu.memory_space<vmem>>, vector<1x1x4x4xf32>
    %4 = vector.shape_cast %3 : vector<1x1x4x4xf32> to vector<4x4xf32>
    %c8 = arith.constant 8 : index
    %c0_8 = arith.constant 0 : index
    %5 = vector.load %arg7[%c8, %c0_8] : memref<12x4xf32, #tpu.memory_space<vmem>>, vector<4x4xf32>
    tpu.vector_store %arg7[%c8, %c0_8], %4 {strides = array<i32>} : memref<12x4xf32, #tpu.memory_space<vmem>>, vector<4x4xf32>,
    %c0_9 = arith.constant 0 : index
    %c0_10 = arith.constant 0 : index
    %6 = vector.load %arg7[%c0_9, %c0_10] : memref<12x4xf32, #tpu.memory_space<vmem>>, vector<12x4xf32>
    %c0_11 = arith.constant 0 : index
    %c0_12 = arith.constant 0 : index
    %7 = vector.load %arg4[%c0_11, %c0_12] : memref<4x640xf32, #tpu.memory_space<vmem>>, vector<4x640xf32>
    %cst = arith.constant dense<0.000000e+00> : vector<12x640xf32>
    %8 = tpu.matmul %6, %7, %cst {dimension_numbers = #tpu.dot_dimension_numbers<[1], [0], [0], [1], [0, 0, 1, 1], [], []>} : vector<12x4xf32>, vector<4x640xf32>, vector<12x640xf32> -> vector<12x640xf32>
    %9 = vector.extract_strided_slice %8 {offsets = [0, 0], sizes = [8, 128], strides = [1, 1]} : vector<12x640xf32> to vector<8x128xf32>
    %10 = vector.extract_strided_slice %8 {offsets = [1, 128], sizes = [8, 128], strides = [1, 1]} : vector<12x640xf32> to vector<8x128xf32>
    %11 = vector.extract_strided_slice %8 {offsets = [2, 256], sizes = [8, 128], strides = [1, 1]} : vector<12x640xf32> to vector<8x128xf32>
    %12 = vector.extract_strided_slice %8 {offsets = [3, 384], sizes = [8, 128], strides = [1, 1]} : vector<12x640xf32> to vector<8x128xf32>
    %13 = vector.extract_strided_slice %8 {offsets = [4, 512], sizes = [8, 128], strides = [1, 1]} : vector<12x640xf32> to vector<8x128xf32>
    %14 = arith.addf %9, %10 : vector<8x128xf32>
    %15 = arith.addf %11, %12 : vector<8x128xf32>
    %16 = arith.addf %14, %15 : vector<8x128xf32>
    %17 = arith.addf %16, %13 : vector<8x128xf32>
    %c0_13 = arith.constant 0 : index
    %c0_14 = arith.constant 0 : index
    %18 = vector.load %arg5[%c0_13, %c0_14] : memref<1x128xf32, #tpu.memory_space<vmem>>, vector<1x128xf32>
    %19 = vector.broadcast %18 : vector<1x128xf32> to vector<8x128xf32>
    %20 = arith.addf %17, %19 : vector<8x128xf32>
    %c0_15 = arith.constant 0 : index
    %c0_16 = arith.constant 0 : index
    %c0_17 = arith.constant 0 : index
    %21 = vector.load %arg6[%c0_15, %c0_16, %c0_17] : memref<1x8x128xf32, #tpu.memory_space<vmem>>, vector<1x8x128xf32>
    %22 = vector.shape_cast %21 : vector<1x8x128xf32> to vector<8x128xf32>
    %23 = vector.shape_cast %20 : vector<8x128xf32> to vector<1x8x128xf32>
    tpu.vector_store %arg6[%c0_15, %c0_16, %c0_17], %23 {strides = array<i32>} : memref<1x8x128xf32, #tpu.memory_space<vmem>>, vector<1x8x128xf32>,
    return
  }
  func.func @transform_0(%arg0: i32, %arg1: i32) -> (i32, i32, i32) {
    %c0_i32 = arith.constant 0 : i32
    %c0_i32_0 = arith.constant 0 : i32
    return %arg0, %arg1, %c0_i32 : i32, i32, i32
  }
  func.func @transform_1(%arg0: i32, %arg1: i32) -> (i32, i32, i32, i32) {
    %c0_i32 = arith.constant 0 : i32
    %c0_i32_0 = arith.constant 0 : i32
    %c0_i32_1 = arith.constant 0 : i32
    return %arg0, %arg1, %c0_i32, %c0_i32_0 : i32, i32, i32, i32
  }
  func.func @transform_2(%arg0: i32, %arg1: i32) -> (i32, i32) {
    %c0_i32 = arith.constant 0 : i32
    %c0_i32_0 = arith.constant 0 : i32
    %c0_i32_1 = arith.constant 0 : i32
    return %c0_i32, %c0_i32_0 : i32, i32
  }
  func.func @transform_3(%arg0: i32, %arg1: i32) -> (i32, i32) {
    %c0_i32 = arith.constant 0 : i32
    %c0_i32_0 = arith.constant 0 : i32
    %c0_i32_1 = arith.constant 0 : i32
    return %c0_i32, %c0_i32_0 : i32, i32
  }
  func.func @transform_4(%arg0: i32, %arg1: i32) -> (i32, i32, i32) {
    %c0_i32 = arith.constant 0 : i32
    %c0_i32_0 = arith.constant 0 : i32
    return %arg0, %arg1, %c0_i32 : i32, i32, i32
  }
}

</mosaic_0001>

<llo_original>
// kernel: tpu_custom_call.1
$region0: #{tpu_custom_call.1}
  #allocation0 [shape = 'u32[]', space=smem, size = 0x4, offset = 0x4, fixed_abs, tag = 'smem constant byte address 0x4 - core index']
  #allocation1 [shape = 'u32[144,128]{1,0:T(1,128)}', space=vmem, size = 0x12000, scoped, tag = 'internal scratch']
  #allocation2 [shape = 'f32[12,4]{1,0:T(8,128)}', space=vmem, size = 0x2000, scoped, tag = 'scratch operand']
  %s0 = inlined_call_operand.vmem [shape: f32[2,20,4], index: 0, kind: input, shape index: {}]
  %s1 = inlined_call_operand.vmem [shape: f32[2,2,4,4], index: 1, kind: input, shape index: {}]
  %s2 = inlined_call_operand.vmem [shape: f32[4,640], index: 2, kind: input, shape index: {}]
  %s3 = inlined_call_operand.vmem [shape: f32[1,128], index: 3, kind: input, shape index: {}]
  %s4 = inlined_call_operand.hbm [shape: f32[2,16,128], index: 4, kind: output, shape index: {}]
  %s5 = sld [smem:[#allocation0]]
  $region49: #{tpu_custom_call.1} parent=0
    _
  %s7 = ssub.s32 1, %s5
  %s8 = scalar_select 0, %s7, %s5
  $region1: #{tpu_custom_call.1} parent=0
    #allocation3 [shape = 'u8[8192]{0}', space=vmem, size = 0x2000, scoped, tag = 'output window, operand 0']
    #allocation4 [shape = 's32[2]{0}', space=sflag, size = 0x8, scoped, tag = 'scoped memory for tpu_custom_call.1']
    %9 = vsyncpa [#allocation4], 0
    %s10 = scalar_lea.sflag [#allocation4], 1
    %11 = vsyncpa %s10, 0
    loop: start=0, step=1, limit=6
    $region2: #{tpu_custom_call.1} parent=1 // loop_pre_header
      _
    $region3: #{tpu_custom_call.1} parent=1 // loop_header
      %s13 = sphi 0, %s17
      %p14 = scmp.ge.s32.totalorder %s13, 6
      %s20 = sphi 0, %s32
      %s21 = sphi 0, %s28
      %s22 = sphi 0, %s20
      %s23 = sphi 0, %s21
      %s24 = sphi 0, %s22
      %s25 = sphi 0, %s23
      %s37 = sphi 0, %s39
      %s40 = sphi 0, %s37
      %s41 = sphi 0, %s40
      %s57 = sphi 0, %s41
      %s65 = sphi 0, %s67
      %s68 = sphi 0, %s65
      %s69 = sphi 0, %s68
      %s85 = sphi 0, %s69
      %s89 = sphi 0, %s89
      %s91 = sphi 0, %s89
      %s92 = sphi 0, %s91
      %s106 = sphi 0, %s92
      %s110 = sphi 0, %s110
      %s112 = sphi 0, %s110
      %s113 = sphi 0, %s112
      %s127 = sphi 0, %s113
      %s135 = sphi 0, %s137
      %s138 = sphi 0, %s135
      %s139 = sphi 0, %s138
      %s155 = sphi 0, %s139
    $region4: #{tpu_custom_call.1} parent=1 // loop_header_branch
      %16 = sbr.rel (%p14) target = $region8
    $region5: #{tpu_custom_call.1} parent=1 // loop_body
      %s18 = ssub.s32 %s13, 1
      %s19 = ssub.s32 %s13, 2
      %s26 = sadd.s32 1, %s21
      %p27 = scmp.ge.s32.totalorder %s26, 2
      %s28 = scalar_select %p27, 0, %s26
      %s29 = sadd.s32 1, %s20
      %s30 = scalar_select %p27, %s29, %s20
      %p31 = scmp.ge.s32.totalorder %s30, 2
      %s32 = scalar_select %p31, 0, %s30
      %s33 = ssub.s32 %s20, %s32
      %s34 = ssub.s32 %s21, %s28
      %s35 = sor.u32 %s33, %s34
      %p36 = scmp.eq.s32.totalorder %s35, 0
      %s38 = sadd.s32 %s37, 1
      %s39 = scalar_select %p36, %s37, %s38
      %p42 = pneg %p36
      %p43 = scmp.eq.s32.totalorder %s13, 3
      %p44 = por %p42, %p43
      %p45 = scmp.ne.s32.totalorder %s37, %s40
      %p46 = scmp.eq.s32.totalorder %s13, 0
      %p47 = por %p45, %p46
      %p48 = scmp.ne.s32.totalorder %s37, %s40
      %p49 = scmp.eq.s32.totalorder %s18, 3
      %p50 = por %p48, %p49
      %p51 = scmp.ne.s32.totalorder %s40, %s41
      %p52 = scmp.eq.s32.totalorder %s18, 0
      %p53 = por %p51, %p52
      %p54 = scmp.ne.s32.totalorder %s40, %s41
      %p55 = scmp.eq.s32.totalorder %s19, 3
      %p56 = por %p54, %p55
      %p58 = scmp.ne.s32.totalorder %s41, %s57
      %p59 = scmp.eq.s32.totalorder %s19, 0
      %p60 = por %p58, %p59
      %s61 = ssub.s32 %s20, %s32
      %s62 = ssub.s32 %s21, %s28
      %s63 = sor.u32 %s61, %s62
      %p64 = scmp.eq.s32.totalorder %s63, 0
      %s66 = sadd.s32 %s65, 1
      %s67 = scalar_select %p64, %s65, %s66
      %p70 = pneg %p64
      %p71 = scmp.eq.s32.totalorder %s13, 3
      %p72 = por %p70, %p71
      %p73 = scmp.ne.s32.totalorder %s65, %s68
      %p74 = scmp.eq.s32.totalorder %s13, 0
      %p75 = por %p73, %p74
      %p76 = scmp.ne.s32.totalorder %s65, %s68
      %p77 = scmp.eq.s32.totalorder %s18, 3
      %p78 = por %p76, %p77
      %p79 = scmp.ne.s32.totalorder %s68, %s69
      %p80 = scmp.eq.s32.totalorder %s18, 0
      %p81 = por %p79, %p80
      %p82 = scmp.ne.s32.totalorder %s68, %s69
      %p83 = scmp.eq.s32.totalorder %s19, 3
      %p84 = por %p82, %p83
      %p86 = scmp.ne.s32.totalorder %s69, %s85
      %p87 = scmp.eq.s32.totalorder %s19, 0
      %p88 = por %p86, %p87
      %s90 = sadd.s32 %s89, 1
      %p93 = scmp.eq.s32.totalorder %s13, 3
      %p94 = scmp.ne.s32.totalorder %s89, %s91
      %p95 = scmp.eq.s32.totalorder %s13, 0
      %p96 = por %p94, %p95
      %p97 = scmp.ne.s32.totalorder %s89, %s91
      %p98 = scmp.eq.s32.totalorder %s18, 3
      %p99 = por %p97, %p98
      %p100 = scmp.ne.s32.totalorder %s91, %s92
      %p101 = scmp.eq.s32.totalorder %s18, 0
      %p102 = por %p100, %p101
      %p103 = scmp.ne.s32.totalorder %s91, %s92
      %p104 = scmp.eq.s32.totalorder %s19, 3
      %p105 = por %p103, %p104
      %p107 = scmp.ne.s32.totalorder %s92, %s106
      %p108 = scmp.eq.s32.totalorder %s19, 0
      %p109 = por %p107, %p108
      %s111 = sadd.s32 %s110, 1
      %p114 = scmp.eq.s32.totalorder %s13, 3
      %p115 = scmp.ne.s32.totalorder %s110, %s112
      %p116 = scmp.eq.s32.totalorder %s13, 0
      %p117 = por %p115, %p116
      %p118 = scmp.ne.s32.totalorder %s110, %s112
      %p119 = scmp.eq.s32.totalorder %s18, 3
      %p120 = por %p118, %p119
      %p121 = scmp.ne.s32.totalorder %s112, %s113
      %p122 = scmp.eq.s32.totalorder %s18, 0
      %p123 = por %p121, %p122
      %p124 = scmp.ne.s32.totalorder %s112, %s113
      %p125 = scmp.eq.s32.totalorder %s19, 3
      %p126 = por %p124, %p125
      %p128 = scmp.ne.s32.totalorder %s113, %s127
      %p129 = scmp.eq.s32.totalorder %s19, 0
      %p130 = por %p128, %p129
      %s131 = ssub.s32 %s20, %s32
      %s132 = ssub.s32 %s21, %s28
      %s133 = sor.u32 %s131, %s132
      %p134 = scmp.eq.s32.totalorder %s133, 0
      %s136 = sadd.s32 %s135, 1
      %s137 = scalar_select %p134, %s135, %s136
      %p140 = pneg %p134
      %p141 = scmp.eq.s32.totalorder %s13, 3
      %p142 = por %p140, %p141
      %p143 = scmp.ne.s32.totalorder %s135, %s138
      %p144 = scmp.eq.s32.totalorder %s13, 0
      %p145 = por %p143, %p144
      %p146 = scmp.ne.s32.totalorder %s135, %s138
      %p147 = scmp.eq.s32.totalorder %s18, 3
      %p148 = por %p146, %p147
      %p149 = scmp.ne.s32.totalorder %s138, %s139
      %p150 = scmp.eq.s32.totalorder %s18, 0
      %p151 = por %p149, %p150
      %p152 = scmp.ne.s32.totalorder %s138, %s139
      %p153 = scmp.eq.s32.totalorder %s19, 3
      %p154 = por %p152, %p153
      %p156 = scmp.ne.s32.totalorder %s139, %s155
      %p157 = scmp.eq.s32.totalorder %s19, 0
      %p158 = por %p156, %p157
      %p159 = scmp.le.s32.totalorder 1, %s13
      %p160 = scmp.lt.s32.totalorder %s13, 5
      %p161 = pnand %p159, %p160
      %p162 = pneg %p161
      // Predicated region
      $region9: #{tpu_custom_call.1} parent=5 // pred_check
        _
      $region10: #{tpu_custom_call.1} parent=5 // pred_check_branch
        %164 = sbr.rel (%p161) target = $region12
      $region11: #{tpu_custom_call.1} parent=5 // pred_region
        %s165 = ssub.s32 %s13, 1
        // Predicated region
        $region13: #{tpu_custom_call.1} parent=11 // pred_check
          %p166 = pneg %p102
        $region14: #{tpu_custom_call.1} parent=11 // pred_check_branch
          %168 = sbr.rel (%p166) target = $region16
        $region15: #{tpu_custom_call.1} parent=11 // pred_region
          _
        $region16: #{tpu_custom_call.1} parent=11 // pred_fallthru
          _
        // Predicated region
        $region17: #{tpu_custom_call.1} parent=11 // pred_check
          %p169 = pneg %p123
        $region18: #{tpu_custom_call.1} parent=11 // pred_check_branch
          %171 = sbr.rel (%p169) target = $region20
        $region19: #{tpu_custom_call.1} parent=11 // pred_region
          _
        $region20: #{tpu_custom_call.1} parent=11 // pred_fallthru
          _
      $region12: #{tpu_custom_call.1} parent=5 // pred_fallthru
        _
      %p172 = scmp.lt.s32.totalorder %s13, 4
      // Predicated region
      $region21: #{tpu_custom_call.1} parent=5 // pred_check
        %p173 = pneg %p172
      $region22: #{tpu_custom_call.1} parent=5 // pred_check_branch
        %175 = sbr.rel (%p173) target = $region24
      $region23: #{tpu_custom_call.1} parent=5 // pred_region
        // Predicated region
        $region25: #{tpu_custom_call.1} parent=23 // pred_check
          %p176 = pneg %p47
        $region26: #{tpu_custom_call.1} parent=23 // pred_check_branch
          %178 = sbr.rel (%p176) target = $region28
        $region27: #{tpu_custom_call.1} parent=23 // pred_region
          %p179 = scmp.lt.s32.totalorder %s20, 1
          %s180 = scalar_select %p179, %s20, 1
          %p181 = scmp.lt.s32.totalorder %s21, 2
          %s182 = scalar_select %p181, %s21, 2
          %s183 = smul.addr %s180, 3
          %s184 = sadd.s32 %s182, %s183
          %s185 = smul.addr %s184, 8
          %s186 = scalar_lea.vmem %s0, %s185
        $region28: #{tpu_custom_call.1} parent=23 // pred_fallthru
          _
        // Predicated region
        $region29: #{tpu_custom_call.1} parent=23 // pred_check
          %p187 = pneg %p75
        $region30: #{tpu_custom_call.1} parent=23 // pred_check_branch
          %189 = sbr.rel (%p187) target = $region32
        $region31: #{tpu_custom_call.1} parent=23 // pred_region
          %p190 = scmp.lt.s32.totalorder %s20, 1
          %s191 = scalar_select %p190, %s20, 1
          %p192 = scmp.lt.s32.totalorder %s21, 1
          %s193 = scalar_select %p192, %s21, 1
          %s194 = smul.addr %s191, 2
          %s195 = sadd.s32 %s193, %s194
          %s196 = smul.addr %s195, 4
          %s197 = scalar_lea.vmem %s1, %s196
        $region32: #{tpu_custom_call.1} parent=23 // pred_fallthru
          _
      $region24: #{tpu_custom_call.1} parent=5 // pred_fallthru
        _
      %p198 = scmp.le.s32.totalorder 1, %s13
      %p199 = scmp.lt.s32.totalorder %s13, 5
      %p200 = pnand %p198, %p199
      %p201 = pneg %p200
      // Predicated region
      $region33: #{tpu_custom_call.1} parent=5 // pred_check
        _
      $region34: #{tpu_custom_call.1} parent=5 // pred_check_branch
        %203 = sbr.rel (%p200) target = $region36
      $region35: #{tpu_custom_call.1} parent=5 // pred_region
        %s204 = ssub.s32 %s13, 1
        %p205 = scmp.lt.s32.totalorder %s22, 1
        %s206 = scalar_select %p205, %s22, 1
        %p207 = scmp.lt.s32.totalorder %s23, 2
        %s208 = scalar_select %p207, %s23, 2
        %s209 = smul.addr %s206, 3
        %s210 = sadd.s32 %s208, %s209
        %s211 = smul.addr %s210, 8
        %s212 = scalar_lea.vmem %s0, %s211
        %p213 = pneg %p53
        %p214 = pneg %p50
        %p215 = scmp.lt.s32.totalorder %s22, 1
        %s216 = scalar_select %p215, %s22, 1
        %p217 = scmp.lt.s32.totalorder %s23, 1
        %s218 = scalar_select %p217, %s23, 1
        %s219 = smul.addr %s216, 2
        %s220 = sadd.s32 %s218, %s219
        %s221 = smul.addr %s220, 4
        %s222 = scalar_lea.vmem %s1, %s221
        %p223 = pneg %p81
        %p224 = pneg %p78
        %p225 = pneg %p102
        %p226 = pneg %p99
        %p227 = pneg %p123
        %p228 = pneg %p120
        %p229 = pneg %p151
        %p230 = pneg %p148
        %s231 = sand.u32 %s138, 1
        %s232 = scalar_lea.sflag [#allocation4], %s231
        %s233 = sand.u32 %s138, 1
        %s234 = smul.addr %s233, 8
        %s235 = scalar_lea.vmem [#allocation3], %s234
        %p236 = scmp.lt.s32.totalorder %s22, 1
        %s237 = scalar_select %p236, %s22, 1
        %p238 = scmp.lt.s32.totalorder %s23, 2
        %s239 = scalar_select %p238, %s23, 2
        %s240 = smul.addr %s237, 3
        %s241 = sadd.s32 %s239, %s240
        %s242 = smul.addr %s241, 8
        %s243 = scalar_lea.vmem %s0, %s242
        %p244 = scmp.lt.s32.totalorder %s22, 1
        %s245 = scalar_select %p244, %s22, 1
        %p246 = scmp.lt.s32.totalorder %s23, 1
        %s247 = scalar_select %p246, %s23, 1
        %s248 = smul.addr %s245, 2
        %s249 = sadd.s32 %s247, %s248
        %s250 = smul.addr %s249, 4
        %s251 = scalar_lea.vmem %s1, %s250
        %v252 = vld [vmem:[%s243] sm:$0xff]
        %vm253 = vcmask 31744
        %254 = vst.msk [vmem:[#allocation2] sm:$0xff] %vm253, %v252
        %v255 = vld [vmem:[%s251] sm:$0xf]
        %vm256 = vcmask 27648
        %257 = vst.msk [vmem:[#allocation2 + $0x8] sm:$0xf] %vm256, %v255
        %v258 = vld [vmem:[#allocation2] sm:$0xff]
        %v259 = vld [vmem:[#allocation2 + $0x8] sm:$0xf]
        %v260 = vld [vmem:[%s2] sm:$0xff]
        %v261 = vld [vmem:[%s2 + $0x8] sm:$0xff]
        %v262 = vld [vmem:[%s2 + $0x10] sm:$0xf]
        %v266 = vcombine.high %v260, %v260
        %v267 = vcombine.high %v261, %v261
        %v269 = vsel %vm253, %v258, 0
        %v272 = vsel %vm253, %v259, 0
        %vm274 = vcmask 1043456
        %v275 = vsel %vm274, %v260, 0
        %v277 = vsel %vm274, %v266, 0
        %v279 = vsel %vm274, %v261, 0
        %v281 = vsel %vm274, %v267, 0
        %v283 = vsel %vm274, %v262, 0
        %285 = vmatprep.subr.mxu0 0.0
        %286 = vmatpush1.msra.mxu0 0.0
        %287 = vmatprep.subr.mxu0 0.0
        %288 = vmatpush1.msra.mxu0 0.0
        %289 = vmatprep.subr.mxu0 0.0
        %290 = vmatpush1.msra.mxu0 0.0
        %291 = vmatprep.subr.mxu0 0.0
        %292 = vmatpush1.msra.mxu0 0.0
        %293 = vmatprep.subr.mxu0 0.0
        %294 = vmatpush1.msra.mxu0 0.0
        %295 = vmatprep.subr.mxu0 0.0
        %296 = vmatpush1.msra.mxu0 0.0
        %297 = vmatprep.subr.mxu0 0.0
        %298 = vmatpush1.msra.mxu0 0.0
        %299 = vmatprep.subr.mxu0 0.0
        %300 = vmatpush1.msra.mxu0 0.0
        %301 = vmatprep.subr.mxu0 0.0
        %302 = vmatpush1.msra.mxu0 0.0
        %303 = vmatprep.subr.mxu0 0.0
        %304 = vmatpush1.msra.mxu0 0.0
        %305 = vmatprep.subr.mxu0 0.0
        %306 = vmatpush1.msra.mxu0 0.0
        %307 = vmatprep.subr.mxu0 0.0
        %308 = vmatpush1.msra.mxu0 0.0
        %309 = vmatprep.subr.mxu0 0.0
        %310 = vmatpush1.msra.mxu0 0.0
        %311 = vmatprep.subr.mxu0 0.0
        %312 = vmatpush1.msra.mxu0 0.0
        %313 = vmatprep.subr.mxu0 0.0
        %314 = vmatpush1.msra.mxu0 0.0
        %315 = vmatprep.subr.mxu0 %v277
        %316 = vmatpush1.msra.mxu0 %v275
        %317 = vmatprep.subr.mxu0 0.0
        %318 = vmatpush2.msra.mxu0 0.0
        %319 = vmatprep.subr.mxu0 0.0
        %320 = vmatpush2.msra.mxu0 0.0
        %321 = vmatprep.subr.mxu0 0.0
        %322 = vmatpush2.msra.mxu0 0.0
        %323 = vmatprep.subr.mxu0 0.0
        %324 = vmatpush2.msra.mxu0 0.0
        %325 = vmatprep.subr.mxu0 0.0
        %326 = vmatpush2.msra.mxu0 0.0
        %327 = vmatprep.subr.mxu0 0.0
        %328 = vmatpush2.msra.mxu0 0.0
        %329 = vmatprep.subr.mxu0 0.0
        %330 = vmatpush2.msra.mxu0 0.0
        %331 = vmatprep.subr.mxu0 0.0
        %332 = vmatpush2.msra.mxu0 0.0
        %333 = vmatprep.subr.mxu0 0.0
        %334 = vmatpush2.msra.mxu0 0.0
        %335 = vmatprep.subr.mxu0 0.0
        %336 = vmatpush2.msra.mxu0 0.0
        %337 = vmatprep.subr.mxu0 0.0
        %338 = vmatpush2.msra.mxu0 0.0
        %339 = vmatprep.subr.mxu0 0.0
        %340 = vmatpush2.msra.mxu0 0.0
        %341 = vmatprep.subr.mxu0 0.0
        %342 = vmatpush2.msra.mxu0 0.0
        %343 = vmatprep.subr.mxu0 0.0
        %344 = vmatpush2.msra.mxu0 0.0
        %345 = vmatprep.subr.mxu0 0.0
        %346 = vmatpush2.msra.mxu0 0.0
        %347 = vmatprep.subr.mxu0 0.0
        %348 = vmatpush2.msra.mxu0 0.0
        %349 = vmatprep.mubr.f32.mxu0 0.0
        %350 = vmatmul.mubr.f32.gmra.mxu0 %v269
        %v351 = vpop.f32.mrf.mxu0
        %v352 = vadd.f32 0.0, %v351
        %v353 = vpop.f32.mrf.mxu0
        %v354 = vadd.f32 0.0, %v353
        %355 = vmatprep.mubr.f32.mxu0 0.0
        %356 = vmatmul.mubr.f32.gmra.mxu0 %v272
        %v357 = vpop.f32.mrf.mxu0
        %v358 = vpop.f32.mrf.mxu0
        %v359 = vadd.f32 0.0, %v358
        %360 = vdwg.mxu0
        %361 = vmatprep.subr.mxu0 0.0
        %362 = vmatpush1.msra.mxu0 0.0
        %363 = vmatprep.subr.mxu0 0.0
        %364 = vmatpush1.msra.mxu0 0.0
        %365 = vmatprep.subr.mxu0 0.0
        %366 = vmatpush1.msra.mxu0 0.0
        %367 = vmatprep.subr.mxu0 0.0
        %368 = vmatpush1.msra.mxu0 0.0
        %369 = vmatprep.subr.mxu0 0.0
        %370 = vmatpush1.msra.mxu0 0.0
        %371 = vmatprep.subr.mxu0 0.0
        %372 = vmatpush1.msra.mxu0 0.0
        %373 = vmatprep.subr.mxu0 0.0
        %374 = vmatpush1.msra.mxu0 0.0
        %375 = vmatprep.subr.mxu0 0.0
        %376 = vmatpush1.msra.mxu0 0.0
        %377 = vmatprep.subr.mxu0 0.0
        %378 = vmatpush1.msra.mxu0 0.0
        %379 = vmatprep.subr.mxu0 0.0
        %380 = vmatpush1.msra.mxu0 0.0
        %381 = vmatprep.subr.mxu0 0.0
        %382 = vmatpush1.msra.mxu0 0.0
        %383 = vmatprep.subr.mxu0 0.0
        %384 = vmatpush1.msra.mxu0 0.0
        %385 = vmatprep.subr.mxu0 0.0
        %386 = vmatpush1.msra.mxu0 0.0
        %387 = vmatprep.subr.mxu0 0.0
        %388 = vmatpush1.msra.mxu0 0.0
        %389 = vmatprep.subr.mxu0 0.0
        %390 = vmatpush1.msra.mxu0 0.0
        %391 = vmatprep.subr.mxu0 %v281
        %392 = vmatpush1.msra.mxu0 %v279
        %393 = vmatprep.subr.mxu0 0.0
        %394 = vmatpush2.msra.mxu0 0.0
        %395 = vmatprep.subr.mxu0 0.0
        %396 = vmatpush2.msra.mxu0 0.0
        %397 = vmatprep.subr.mxu0 0.0
        %398 = vmatpush2.msra.mxu0 0.0
        %399 = vmatprep.subr.mxu0 0.0
        %400 = vmatpush2.msra.mxu0 0.0
        %401 = vmatprep.subr.mxu0 0.0
        %402 = vmatpush2.msra.mxu0 0.0
        %403 = vmatprep.subr.mxu0 0.0
        %404 = vmatpush2.msra.mxu0 0.0
        %405 = vmatprep.subr.mxu0 0.0
        %406 = vmatpush2.msra.mxu0 0.0
        %407 = vmatprep.subr.mxu0 0.0
        %408 = vmatpush2.msra.mxu0 0.0
        %409 = vmatprep.subr.mxu0 0.0
        %410 = vmatpush2.msra.mxu0 0.0
        %411 = vmatprep.subr.mxu0 0.0
        %412 = vmatpush2.msra.mxu0 0.0
        %413 = vmatprep.subr.mxu0 0.0
        %414 = vmatpush2.msra.mxu0 0.0
        %415 = vmatprep.subr.mxu0 0.0
        %416 = vmatpush2.msra.mxu0 0.0
        %417 = vmatprep.subr.mxu0 0.0
        %418 = vmatpush2.msra.mxu0 0.0
        %419 = vmatprep.subr.mxu0 0.0
        %420 = vmatpush2.msra.mxu0 0.0
        %421 = vmatprep.subr.mxu0 0.0
        %422 = vmatpush2.msra.mxu0 0.0
        %423 = vmatprep.subr.mxu0 0.0
        %424 = vmatpush2.msra.mxu0 0.0
        %425 = vmatprep.mubr.f32.mxu0 0.0
        %426 = vmatmul.mubr.f32.gmra.mxu0 %v269
        %v427 = vpop.f32.mrf.mxu0
        %v428 = vadd.f32 0.0, %v427
        %v429 = vpop.f32.mrf.mxu0
        %v430 = vadd.f32 0.0, %v429
        %431 = vmatprep.mubr.f32.mxu0 0.0
        %432 = vmatmul.mubr.f32.gmra.mxu0 %v272
        %v433 = vpop.f32.mrf.mxu0
        %v434 = vadd.f32 0.0, %v433
        %v435 = vpop.f32.mrf.mxu0
        %v436 = vadd.f32 0.0, %v435
        %437 = vdwg.mxu0
        %438 = vmatprep.subr.mxu0 0.0
        %439 = vmatpush1.msra.mxu0 0.0
        %440 = vmatprep.subr.mxu0 0.0
        %441 = vmatpush1.msra.mxu0 0.0
        %442 = vmatprep.subr.mxu0 0.0
        %443 = vmatpush1.msra.mxu0 0.0
        %444 = vmatprep.subr.mxu0 0.0
        %445 = vmatpush1.msra.mxu0 0.0
        %446 = vmatprep.subr.mxu0 0.0
        %447 = vmatpush1.msra.mxu0 0.0
        %448 = vmatprep.subr.mxu0 0.0
        %449 = vmatpush1.msra.mxu0 0.0
        %450 = vmatprep.subr.mxu0 0.0
        %451 = vmatpush1.msra.mxu0 0.0
        %452 = vmatprep.subr.mxu0 0.0
        %453 = vmatpush1.msra.mxu0 0.0
        %454 = vmatprep.subr.mxu0 0.0
        %455 = vmatpush1.msra.mxu0 0.0
        %456 = vmatprep.subr.mxu0 0.0
        %457 = vmatpush1.msra.mxu0 0.0
        %458 = vmatprep.subr.mxu0 0.0
        %459 = vmatpush1.msra.mxu0 0.0
        %460 = vmatprep.subr.mxu0 0.0
        %461 = vmatpush1.msra.mxu0 0.0
        %462 = vmatprep.subr.mxu0 0.0
        %463 = vmatpush1.msra.mxu0 0.0
        %464 = vmatprep.subr.mxu0 0.0
        %465 = vmatpush1.msra.mxu0 0.0
        %466 = vmatprep.subr.mxu0 0.0
        %467 = vmatpush1.msra.mxu0 0.0
        %468 = vmatprep.subr.mxu0 0.0
        %469 = vmatpush1.msra.mxu0 %v283
        %470 = vmatprep.subr.mxu0 0.0
        %471 = vmatpush2.msra.mxu0 0.0
        %472 = vmatprep.subr.mxu0 0.0
        %473 = vmatpush2.msra.mxu0 0.0
        %474 = vmatprep.subr.mxu0 0.0
        %475 = vmatpush2.msra.mxu0 0.0
        %476 = vmatprep.subr.mxu0 0.0
        %477 = vmatpush2.msra.mxu0 0.0
        %478 = vmatprep.subr.mxu0 0.0
        %479 = vmatpush2.msra.mxu0 0.0
        %480 = vmatprep.subr.mxu0 0.0
        %481 = vmatpush2.msra.mxu0 0.0
        %482 = vmatprep.subr.mxu0 0.0
        %483 = vmatpush2.msra.mxu0 0.0
        %484 = vmatprep.subr.mxu0 0.0
        %485 = vmatpush2.msra.mxu0 0.0
        %486 = vmatprep.subr.mxu0 0.0
        %487 = vmatpush2.msra.mxu0 0.0
        %488 = vmatprep.subr.mxu0 0.0
        %489 = vmatpush2.msra.mxu0 0.0
        %490 = vmatprep.subr.mxu0 0.0
        %491 = vmatpush2.msra.mxu0 0.0
        %492 = vmatprep.subr.mxu0 0.0
        %493 = vmatpush2.msra.mxu0 0.0
        %494 = vmatprep.subr.mxu0 0.0
        %495 = vmatpush2.msra.mxu0 0.0
        %496 = vmatprep.subr.mxu0 0.0
        %497 = vmatpush2.msra.mxu0 0.0
        %498 = vmatprep.subr.mxu0 0.0
        %499 = vmatpush2.msra.mxu0 0.0
        %500 = vmatprep.subr.mxu0 0.0
        %501 = vmatpush2.msra.mxu0 0.0
        %502 = vmatprep.mubr.f32.mxu0 0.0
        %503 = vmatmul.mubr.f32.gmra.mxu0 %v269
        %v504 = vpop.f32.mrf.mxu0
        %v505 = vadd.f32 0.0, %v504
        %v506 = vpop.f32.mrf.mxu0
        %507 = vmatprep.mubr.f32.mxu0 0.0
        %508 = vmatmul.mubr.f32.gmra.mxu0 %v272
        %v509 = vpop.f32.mrf.mxu0
        %v510 = vadd.f32 0.0, %v509
        %v511 = vpop.f32.mrf.mxu0
        %512 = vdwg.mxu0
        %vm515 = vcmask 1046528
        %v516 = vrot.slane %v354, 1
        %v517 = vrot.slane %v359, 1
        %v518 = vsel %vm515, %v516, %v517
        %v520 = vadd.f32 %v352, %v518
        %v523 = vrot.slane %v430, 1
        %v524 = vrot.slane %v436, 1
        %v525 = vsel %vm515, %v523, %v524
        %v528 = vadd.f32 %v428, %v525
        %v529 = vadd.f32 %v434, %v524
        %vm532 = vcmask 1045504
        %v533 = vrot.slane %v528, 2
        %v534 = vrot.slane %v529, 2
        %v535 = vsel %vm532, %v533, %v534
        %v537 = vadd.f32 %v520, %v535
        %v540 = vrot.slane %v505, 4
        %v541 = vrot.slane %v510, 4
        %v542 = vsel %vm274, %v540, %v541
        %v544 = vadd.f32 %v537, %v542
        %v545 = vld [vmem:[%s3] sm:$0x1]
        %v547 = vlaneseq
        %v548 = vshrl.u32 %v547, 7
        %v549 = vsub.s32 0, %v548
        %v550 = vrot.slane %v545, %v549
        %v552 = vadd.f32 %v544, %v550
        %553 = vst [vmem:[%s235] sm:$0xff] %v552
        %s554 = sand.u32 %s138, 1
        %s555 = scalar_lea.sflag [#allocation4], %s554
        %s556 = sand.u32 %s138, 1
        %s557 = smul.addr %s556, 8
        %s558 = scalar_lea.vmem [#allocation3], %s557
        // Predicated region
        $region37: #{tpu_custom_call.1} parent=35 // pred_check
          %p559 = pneg %p148
        $region38: #{tpu_custom_call.1} parent=35 // pred_check_branch
          %561 = sbr.rel (%p559) target = $region40
        $region39: #{tpu_custom_call.1} parent=35 // pred_region
          %s563 = ssub.s32 128, 128
          %564 = vsyncadd %s555, %s563
          %s565 = smul.addr %s22, 2
          %s566 = sadd.s32 %s23, %s565
          %s567 = smul.addr %s566, 128
          %s568 = scalar_lea.hbm %s4, %s567
          %s570 = sshll.u32 %s558, 4
          %s571 = int_to_ptr.vmem [resolvable:$true] %s570
          %573 = dma.vmem_to_hbm [thread:$0]  %s571, 128, %s568, %s555
        $region40: #{tpu_custom_call.1} parent=35 // pred_fallthru
          _
      $region36: #{tpu_custom_call.1} parent=5 // pred_fallthru
        _
      %p574 = scmp.le.s32.totalorder 2, %s13
      // Predicated region
      $region41: #{tpu_custom_call.1} parent=5 // pred_check
        %p575 = pneg %p574
      $region42: #{tpu_custom_call.1} parent=5 // pred_check_branch
        %577 = sbr.rel (%p575) target = $region44
      $region43: #{tpu_custom_call.1} parent=5 // pred_region
        %s578 = ssub.s32 %s13, 2
        // Predicated region
        $region45: #{tpu_custom_call.1} parent=43 // pred_check
          %p579 = pneg %p154
        $region46: #{tpu_custom_call.1} parent=43 // pred_check_branch
          %581 = sbr.rel (%p579) target = $region48
        $region47: #{tpu_custom_call.1} parent=43 // pred_region
          %s582 = sand.u32 %s139, 1
          %s583 = scalar_lea.sflag [#allocation4], %s582
          %s584 = sand.u32 %s139, 1
          %s585 = smul.addr %s584, 8
          %s586 = scalar_lea.vmem [#allocation3], %s585
          %587 = dma.done %s583, 128
        $region48: #{tpu_custom_call.1} parent=43 // pred_fallthru
          _
      $region44: #{tpu_custom_call.1} parent=5 // pred_fallthru
        _
    $region6: #{tpu_custom_call.1} parent=1 // loop_footer
      %s17 = sadd.s32 1, %s13
    $region7: #{tpu_custom_call.1} parent=1 // loop_footer_branch
      %12 = sbr.rel target = $region3
    $region8: #{tpu_custom_call.1} parent=1 // loop_exit
      _
    %588 = vsyncpa [#allocation4], 1
    %s589 = scalar_lea.sflag [#allocation4], 1
    %590 = vsyncpa %s589, 1

</llo_original>
